<compile_context>
chip_gen: v7x
topology: tpu7x:2x2x1
jax: 0.10.0
libtpu: 0.0.40
codegen_flags: <defaults>
</compile_context>

<pallas_src>
import jax
import jax.numpy as jnp
from jax.experimental import pallas as pl
from jax.experimental.pallas import tpu as pltpu


# ----------------------------------------------------------------------------
# Kernels
# ----------------------------------------------------------------------------
def _fused_copy_kernel(*refs):
    """First half of refs are inputs, second half are outputs: copy each."""
    n = len(refs) // 2
    for i_ref, o_ref in zip(refs[:n], refs[n:]):
        o_ref[...] = i_ref[...]


def _tiled_copy_kernel(x_ref, o_ref):
    o_ref[...] = x_ref[...]


# ----------------------------------------------------------------------------
# Helpers
# ----------------------------------------------------------------------------
def _lane_dense_2d(a: jax.Array) -> jax.Array:
    """Reshape to a 2D view whose last dim is a large multiple of 128.

    Lane-dense outputs use full-width unmasked stores (the single vst slot per
    bundle is the copy bottleneck, esp. on v5e).  Reshape of a contiguous
    row-major array is metadata-only on the wrapper side.
    """
    n = int(a.size)
    for lanes in (2048, 1024, 512, 256, 128):
        if n % lanes == 0:
            return a.reshape(n // lanes, lanes)
    # Fallback: one full-extent row (compiler pads the lane tile internally).
    return a.reshape(1, max(n, 1))


def _bytes(v: jax.Array) -> int:
    return int(v.size) * v.dtype.itemsize


# ----------------------------------------------------------------------------
# Fused single-launch copy for several (small) tensors
# ----------------------------------------------------------------------------
def fused_identity_copy(*arrays: jax.Array, donate: bool = False):
    """Materialize copies of several arrays in ONE pallas_call.

    Intended for small tensors where per-launch overhead dominates; every
    array is held fully resident in VMEM (full-extent blocks, grid=(1,)).
    """
    views = [_lane_dense_2d(a) for a in arrays]
    n = len(views)
    total_bytes = sum(_bytes(v) for v in views)

    extra = {}
    if donate:
        # Alias each output onto its input buffer (no second HBM allocation).
        extra["input_output_aliases"] = {i: i for i in range(n)}

    outs = pl.pallas_call(
        _fused_copy_kernel,
        out_shape=[jax.ShapeDtypeStruct(v.shape, v.dtype) for v in views],
        grid=(1,),
        in_specs=[pl.BlockSpec(v.shape, lambda i: (0, 0)) for v in views],
        out_specs=[pl.BlockSpec(v.shape, lambda i: (0, 0)) for v in views],
        cost_estimate=pl.CostEstimate(
            flops=0, transcendentals=0, bytes_accessed=2 * total_bytes
        ),
        **extra,
    )(*views)

    return tuple(o.reshape(a.shape) for o, a in zip(outs, arrays))


# ----------------------------------------------------------------------------
# Tiled copy for a single (possibly large) tensor
# ----------------------------------------------------------------------------
def pallas_identity_copy(x: jax.Array, donate: bool = False) -> jax.Array:
    """Tiled lane-dense HBM->VMEM->HBM identity copy of one array."""
    v = _lane_dense_2d(x)
    rows, cols = v.shape
    # 512 x 1024 f32 tile = 2 MiB; in+out double-buffered = 8 MiB -> fits the
    # default scoped VMEM on v5e (16 MiB), v6e (32 MiB) and v7x (32 MiB) while
    # reaching ~85% of the HBM copy roofline.
    tr = rows if rows <= 512 else 512
    tc = cols if cols <= 1024 else 1024
    grid = (pl.cdiv(rows, tr), pl.cdiv(cols, tc))

    extra = {}
    if donate:
        extra["input_output_aliases"] = {0: 0}

    out = pl.pallas_call(
        _tiled_copy_kernel,
        out_shape=jax.ShapeDtypeStruct((rows, cols), v.dtype),
        grid_spec=pltpu.PrefetchScalarGridSpec(
            num_scalar_prefetch=0,
            grid=grid,
            in_specs=[pl.BlockSpec((tr, tc), lambda i, j: (i, j))],
            out_specs=pl.BlockSpec((tr, tc), lambda i, j: (i, j)),
        ),
        compiler_params=pltpu.CompilerParams(
            # No-op on single-TC v5e/v6e; shards grid over the 2 TCs on v7x.
            dimension_semantics=("parallel", "parallel")
        ),
        cost_estimate=pl.CostEstimate(
            flops=0, transcendentals=0, bytes_accessed=2 * _bytes(v)
        ),
        **extra,
    )(v)
    return out.reshape(x.shape)


# ----------------------------------------------------------------------------
# Module
# ----------------------------------------------------------------------------
class AttModule:
    """JAX port of the PyTorch AttModule (attention abstraction).

    forward() is a pure pass-through, so no kernel is launched: the inputs are
    returned unchanged (zero copies, zero dispatch).  Use fused_identity_copy /
    pallas_identity_copy only if a materialized copy is explicitly required.
    """

    def __init__(self):
        self.export_mode = False

    def set_export(self, mode: bool = True):
        self.export_mode = mode

    def __call__(self, x, memory=None, pos_emb=None, att_mask=None):
        # Exact semantics of the PyTorch forward: return the inputs as-is.
        return (x, memory, pos_emb, att_mask)


# ----------------------------------------------------------------------------
# Demo / self-test
# ----------------------------------------------------------------------------
if __name__ == "__main__":
    key = jax.random.PRNGKey(0)
    k1, k2, k3 = jax.random.split(key, 3)

    batch, seq, hidden = 2, 8, 32
    mem_seq = 8

    x = jax.random.normal(k1, (batch, seq, hidden), dtype=jnp.float32)
    memory = jax.random.normal(k2, (batch, mem_seq, hidden), dtype=jnp.float32)
    pos_emb = jax.random.normal(k3, (1, 2 * seq - 1, hidden), dtype=jnp.float32)
    att_mask = jnp.ones((batch, 1, seq), dtype=jnp.bool_)

    # 1) Module forward: pure pass-through, no kernel launched.
    mod = AttModule()
    x_o, mem_o, pos_o, mask_o = mod(x, memory, pos_emb, att_mask)
    jax.block_until_ready((x_o, mem_o, pos_o, mask_o))

    assert x_o.shape == x.shape and x_o.dtype == x.dtype
    assert mem_o.shape == memory.shape
    assert pos_o.shape == pos_emb.shape
    assert mask_o.shape == att_mask.shape and mask_o.dtype == att_mask.dtype
    assert bool(jnp.array_equal(x_o, x))
    assert bool(jnp.array_equal(mem_o, memory))
    assert bool(jnp.array_equal(pos_o, pos_emb))
    assert bool(jnp.array_equal(mask_o, att_mask))

    # 2) Exercise the Pallas copy paths once (for the case where a
    #    materialized copy is required): one fused launch for the three float
    #    tensors; bool mask intentionally stays out of Pallas.
    xc, memc, posc = fused_identity_copy(x, memory, pos_emb, donate=False)
    xt = pallas_identity_copy(x, donate=False)
    jax.block_until_ready((xc, memc, posc, xt))

    assert bool(jnp.array_equal(xc, x))
    assert bool(jnp.array_equal(memc, memory))
    assert bool(jnp.array_equal(posc, pos_emb))
    assert bool(jnp.array_equal(xt, x))

    print("KERNEL_OK")
</pallas_src>

<mosaic_0001>
module attributes {stable_mosaic.version = 11 : i64} {
  func.func @_fused_copy_kernel(%arg0: i32, %arg1: memref<1x512xf32, #tpu.memory_space<vmem>>, %arg2: memref<1x512xf32, #tpu.memory_space<vmem>>, %arg3: memref<1x480xf32, #tpu.memory_space<vmem>>, %arg4: memref<1x512xf32, #tpu.memory_space<vmem>>, %arg5: memref<1x512xf32, #tpu.memory_space<vmem>>, %arg6: memref<1x480xf32, #tpu.memory_space<vmem>>) attributes {dimension_semantics = [#tpu.dimension_semantics<arbitrary>], iteration_bounds = array<i64: 1>, scalar_prefetch = 0 : i64, scratch_operands = 0 : i64, tpu.core_type = #tpu.core_type<tc>, window_params = [{pipeline_mode = #tpu.pipeline_mode<synchronous>, transform_indices = @transform_0, window_bounds = array<i64: 1, 512>}, {pipeline_mode = #tpu.pipeline_mode<synchronous>, transform_indices = @transform_1, window_bounds = array<i64: 1, 512>}, {pipeline_mode = #tpu.pipeline_mode<synchronous>, transform_indices = @transform_2, window_bounds = array<i64: 1, 480>}, {pipeline_mode = #tpu.pipeline_mode<synchronous>, transform_indices = @transform_3, window_bounds = array<i64: 1, 512>}, {pipeline_mode = #tpu.pipeline_mode<synchronous>, transform_indices = @transform_4, window_bounds = array<i64: 1, 512>}, {pipeline_mode = #tpu.pipeline_mode<synchronous>, transform_indices = @transform_5, window_bounds = array<i64: 1, 480>}]} {
    %c0 = arith.constant 0 : index
    %c0_0 = arith.constant 0 : index
    %0 = vector.load %arg1[%c0, %c0_0] : memref<1x512xf32, #tpu.memory_space<vmem>>, vector<1x512xf32>
    %c0_1 = arith.constant 0 : index
    %c0_2 = arith.constant 0 : index
    %1 = vector.load %arg4[%c0_1, %c0_2] : memref<1x512xf32, #tpu.memory_space<vmem>>, vector<1x512xf32>
    tpu.vector_store %arg4[%c0_1, %c0_2], %0 {strides = array<i32>} : memref<1x512xf32, #tpu.memory_space<vmem>>, vector<1x512xf32>,
    %c0_3 = arith.constant 0 : index
    %c0_4 = arith.constant 0 : index
    %2 = vector.load %arg2[%c0_3, %c0_4] : memref<1x512xf32, #tpu.memory_space<vmem>>, vector<1x512xf32>
    %c0_5 = arith.constant 0 : index
    %c0_6 = arith.constant 0 : index
    %3 = vector.load %arg5[%c0_5, %c0_6] : memref<1x512xf32, #tpu.memory_space<vmem>>, vector<1x512xf32>
    tpu.vector_store %arg5[%c0_5, %c0_6], %2 {strides = array<i32>} : memref<1x512xf32, #tpu.memory_space<vmem>>, vector<1x512xf32>,
    %c0_7 = arith.constant 0 : index
    %c0_8 = arith.constant 0 : index
    %4 = vector.load %arg3[%c0_7, %c0_8] : memref<1x480xf32, #tpu.memory_space<vmem>>, vector<1x480xf32>
    %c0_9 = arith.constant 0 : index
    %c0_10 = arith.constant 0 : index
    %5 = vector.load %arg6[%c0_9, %c0_10] : memref<1x480xf32, #tpu.memory_space<vmem>>, vector<1x480xf32>
    tpu.vector_store %arg6[%c0_9, %c0_10], %4 {strides = array<i32>} : memref<1x480xf32, #tpu.memory_space<vmem>>, vector<1x480xf32>,
    return
  }
  func.func @transform_0(%arg0: i32) -> (i32, i32) {
    %c0_i32 = arith.constant 0 : i32
    %c0_i32_0 = arith.constant 0 : i32
    %c0_i32_1 = arith.constant 0 : i32
    return %c0_i32, %c0_i32_0 : i32, i32
  }
  func.func @transform_1(%arg0: i32) -> (i32, i32) {
    %c0_i32 = arith.constant 0 : i32
    %c0_i32_0 = arith.constant 0 : i32
    %c0_i32_1 = arith.constant 0 : i32
    return %c0_i32, %c0_i32_0 : i32, i32
  }
  func.func @transform_2(%arg0: i32) -> (i32, i32) {
    %c0_i32 = arith.constant 0 : i32
    %c0_i32_0 = arith.constant 0 : i32
    %c0_i32_1 = arith.constant 0 : i32
    return %c0_i32, %c0_i32_0 : i32, i32
  }
  func.func @transform_3(%arg0: i32) -> (i32, i32) {
    %c0_i32 = arith.constant 0 : i32
    %c0_i32_0 = arith.constant 0 : i32
    %c0_i32_1 = arith.constant 0 : i32
    return %c0_i32, %c0_i32_0 : i32, i32
  }
  func.func @transform_4(%arg0: i32) -> (i32, i32) {
    %c0_i32 = arith.constant 0 : i32
    %c0_i32_0 = arith.constant 0 : i32
    %c0_i32_1 = arith.constant 0 : i32
    return %c0_i32, %c0_i32_0 : i32, i32
  }
  func.func @transform_5(%arg0: i32) -> (i32, i32) {
    %c0_i32 = arith.constant 0 : i32
    %c0_i32_0 = arith.constant 0 : i32
    %c0_i32_1 = arith.constant 0 : i32
    return %c0_i32, %c0_i32_0 : i32, i32
  }
}

</mosaic_0001>

<llo_original>
// kernel: tpu_custom_call.1
$region0: #{tpu_custom_call.1}
  #allocation0 [shape = 'u32[]', space=smem, size = 0x4, offset = 0x4, fixed_abs, tag = 'smem constant byte address 0x4 - core index']
  #allocation1 [shape = 'u32[144,128]{1,0:T(1,128)}', space=vmem, size = 0x12000, scoped, tag = 'internal scratch']
  %s0 = inlined_call_operand.hbm [shape: f32[1,512], index: 0, kind: input, shape index: {}]
  %s1 = inlined_call_operand.hbm [shape: f32[1,512], index: 1, kind: input, shape index: {}]
  %s2 = inlined_call_operand.vmem [shape: f32[1,480], index: 2, kind: input, shape index: {}]
  %s3 = inlined_call_operand.hbm [shape: f32[1,512], index: 3, kind: output, shape index: {0}]
  %s4 = inlined_call_operand.hbm [shape: f32[1,512], index: 4, kind: output, shape index: {1}]
  %s5 = inlined_call_operand.hbm [shape: f32[1,480], index: 5, kind: output, shape index: {2}]
  %6 = xla_tuple %s3, %s4, %s5
  %s7 = sld [smem:[#allocation0]]
  $region46: #{tpu_custom_call.1} parent=0
    _
  %s9 = ssub.s32 1, %s7
  %s10 = scalar_select 0, %s9, %s7
  $region1: #{tpu_custom_call.1} parent=0
    #allocation2 [shape = 'u8[2048]{0}', space=vmem, size = 0x800, scoped, tag = 'input window, operand 0, single buffered']
    #allocation3 [shape = 's32[1]{0}', space=sflag, size = 0x4, scoped, tag = 'scoped memory for tpu_custom_call.1']
    #allocation4 [shape = 's32[1]{0}', space=sflag, size = 0x4, scoped, tag = 'scoped memory for tpu_custom_call.1']
    #allocation5 [shape = 'u8[2048]{0}', space=vmem, size = 0x800, scoped, tag = 'input window, operand 1, single buffered']
    #allocation6 [shape = 's32[1]{0}', space=sflag, size = 0x4, scoped, tag = 'scoped memory for tpu_custom_call.1']
    #allocation7 [shape = 'u8[2048]{0}', space=vmem, size = 0x800, scoped, tag = 'output window, operand 0, single buffered']
    #allocation8 [shape = 'u8[2048]{0}', space=vmem, size = 0x800, scoped, tag = 'output window, operand 1, single buffered']
    #allocation9 [shape = 's32[1]{0}', space=sflag, size = 0x4, scoped, tag = 'scoped memory for tpu_custom_call.1']
    #allocation10 [shape = 'u8[2048]{0}', space=vmem, size = 0x800, scoped, tag = 'output window, operand 2, single buffered']
    %11 = vsyncpa [#allocation3], 0
    %12 = vsyncpa [#allocation6], 0
    %13 = vsyncpa [#allocation4], 0
    %14 = vsyncpa [#allocation9], 0
    // Predicated region
    $region2: #{tpu_custom_call.1} parent=1 // pred_check
      _
    $region3: #{tpu_custom_call.1} parent=1 // pred_check_branch
      %16 = sbr.rel (0) target = $region5
    $region4: #{tpu_custom_call.1} parent=1 // pred_region
      %s18 = ssub.s32 64, 64
      %19 = vsyncadd [#allocation3], %s18
      %s21 = sshll.u32 [#allocation2], 4
      %s22 = int_to_ptr.vmem [resolvable:$true] %s21
      %24 = dma.hbm_to_vmem [thread:$0]  %s0, 64, %s22, [#allocation3]
    $region5: #{tpu_custom_call.1} parent=1 // pred_fallthru
      _
    // Predicated region
    $region6: #{tpu_custom_call.1} parent=1 // pred_check
      _
    $region7: #{tpu_custom_call.1} parent=1 // pred_check_branch
      %26 = sbr.rel (0) target = $region9
    $region8: #{tpu_custom_call.1} parent=1 // pred_region
      %s28 = ssub.s32 64, 64
      %29 = vsyncadd [#allocation6], %s28
      %s31 = sshll.u32 [#allocation5], 4
      %s32 = int_to_ptr.vmem [resolvable:$true] %s31
      %34 = dma.hbm_to_vmem [thread:$0]  %s1, 64, %s32, [#allocation6]
    $region9: #{tpu_custom_call.1} parent=1 // pred_fallthru
      _
    // Predicated region
    $region10: #{tpu_custom_call.1} parent=1 // pred_check
      _
    $region11: #{tpu_custom_call.1} parent=1 // pred_check_branch
      %36 = sbr.rel (0) target = $region13
    $region12: #{tpu_custom_call.1} parent=1 // pred_region
      _
    $region13: #{tpu_custom_call.1} parent=1 // pred_fallthru
      _
    // Predicated region
    $region14: #{tpu_custom_call.1} parent=1 // pred_check
      _
    $region15: #{tpu_custom_call.1} parent=1 // pred_check_branch
      %38 = sbr.rel (0) target = $region17
    $region16: #{tpu_custom_call.1} parent=1 // pred_region
      %39 = dma.done [#allocation3], 64
    $region17: #{tpu_custom_call.1} parent=1 // pred_fallthru
      _
    // Predicated region
    $region18: #{tpu_custom_call.1} parent=1 // pred_check
      _
    $region19: #{tpu_custom_call.1} parent=1 // pred_check_branch
      %41 = sbr.rel (0) target = $region21
    $region20: #{tpu_custom_call.1} parent=1 // pred_region
      %42 = dma.done [#allocation6], 64
    $region21: #{tpu_custom_call.1} parent=1 // pred_fallthru
      _
    %v43 = vld [vmem:[#allocation2] sm:$0xf]
    %v44 = vlaneseq
    %vm45 = vcmp.ge.s32.totalorder %v44, 0
    %vm46 = vcmp.lt.s32.totalorder %v44, 512
    %vm47 = vmand %vm45, %vm46
    %48 = vst.msk [vmem:[#allocation7] sm:$0xf] %vm47, %v43
    %v49 = vld [vmem:[#allocation5] sm:$0xf]
    %50 = vst.msk [vmem:[#allocation8] sm:$0xf] %vm47, %v49
    %v51 = vld [vmem:[%s2] sm:$0xf]
    %vm52 = vcmp.lt.s32.totalorder %v44, 480
    %vm53 = vmand %vm45, %vm52
    %54 = vst.msk [vmem:[#allocation10] sm:$0xf] %vm53, %v51
    // Predicated region
    $region22: #{tpu_custom_call.1} parent=1 // pred_check
      _
    $region23: #{tpu_custom_call.1} parent=1 // pred_check_branch
      %56 = sbr.rel (0) target = $region25
    $region24: #{tpu_custom_call.1} parent=1 // pred_region
      %s58 = ssub.s32 64, 64
      %59 = vsyncadd [#allocation4], %s58
      %s61 = sshll.u32 [#allocation7], 4
      %s62 = int_to_ptr.vmem [resolvable:$true] %s61
      %64 = dma.vmem_to_hbm [thread:$0]  %s62, 64, %s3, [#allocation4]
    $region25: #{tpu_custom_call.1} parent=1 // pred_fallthru
      _
    // Predicated region
    $region26: #{tpu_custom_call.1} parent=1 // pred_check
      _
    $region27: #{tpu_custom_call.1} parent=1 // pred_check_branch
      %66 = sbr.rel (0) target = $region29
    $region28: #{tpu_custom_call.1} parent=1 // pred_region
      %s68 = ssub.s32 64, 64
      %69 = vsyncadd [#allocation9], %s68
      %s71 = sshll.u32 [#allocation8], 4
      %s72 = int_to_ptr.vmem [resolvable:$true] %s71
      %74 = dma.vmem_to_hbm [thread:$0]  %s72, 64, %s4, [#allocation9]
    $region29: #{tpu_custom_call.1} parent=1 // pred_fallthru
      _
    // Predicated region
    $region30: #{tpu_custom_call.1} parent=1 // pred_check
      _
    $region31: #{tpu_custom_call.1} parent=1 // pred_check_branch
      %76 = sbr.rel (0) target = $region33
    $region32: #{tpu_custom_call.1} parent=1 // pred_region
      %s78 = ssub.s32 64, 64
      %79 = vsyncadd [#allocation9], %s78
      %s81 = sshll.u32 [#allocation10], 4
      %s82 = int_to_ptr.vmem [resolvable:$true] %s81
      %84 = dma.vmem_to_hbm [thread:$0]  %s82, 64, %s5, [#allocation9]
    $region33: #{tpu_custom_call.1} parent=1 // pred_fallthru
      _
    // Predicated region
    $region34: #{tpu_custom_call.1} parent=1 // pred_check
      _
    $region35: #{tpu_custom_call.1} parent=1 // pred_check_branch
      %86 = sbr.rel (0) target = $region37
    $region36: #{tpu_custom_call.1} parent=1 // pred_region
      %87 = dma.done [#allocation4], 64
    $region37: #{tpu_custom_call.1} parent=1 // pred_fallthru
      _
    // Predicated region
    $region38: #{tpu_custom_call.1} parent=1 // pred_check
      _
    $region39: #{tpu_custom_call.1} parent=1 // pred_check_branch
      %89 = sbr.rel (0) target = $region41
    $region40: #{tpu_custom_call.1} parent=1 // pred_region
      %90 = dma.done [#allocation9], 64
    $region41: #{tpu_custom_call.1} parent=1 // pred_fallthru
      _
    // Predicated region
    $region42: #{tpu_custom_call.1} parent=1 // pred_check
      _
    $region43: #{tpu_custom_call.1} parent=1 // pred_check_branch
      %92 = sbr.rel (0) target = $region45
    $region44: #{tpu_custom_call.1} parent=1 // pred_region
      %93 = dma.done [#allocation9], 64
    $region45: #{tpu_custom_call.1} parent=1 // pred_fallthru
      _
    %94 = vsyncpa [#allocation3], 1
    %95 = vsyncpa [#allocation6], 1
    %96 = vsyncpa [#allocation4], 1
    %97 = vsyncpa [#allocation9], 1

</llo_original>
